<compile_context>
chip_gen: v6e
topology: v6e:2x2x1
jax: 0.10.0
libtpu: 0.0.40
codegen_flags: <defaults>
</compile_context>

<pallas_src>
import functools

import jax
import jax.numpy as jnp
from jax.experimental import pallas as pl
from jax.experimental.pallas import tpu as pltpu


# ----------------------------- helpers --------------------------------------

def _round_up(v, m):
    return (v + m - 1) // m * m


def _device_generation():
    """Best-effort TPU generation tag ('v5' / 'v6' / 'v7') from device_kind."""
    try:
        kind = jax.devices()[0].device_kind.lower()
    except Exception:
        return None
    for tag in ("v7", "v6", "v5"):
        if tag in kind:
            return tag
    return None


def _vmem_limit_bytes():
    """Scoped VMEM limit: 3/4 of physical capacity, safe on every generation."""
    try:
        return int(pltpu.get_tpu_info().vmem_capacity_bytes * 3 // 4)
    except Exception:
        return 48 * 1024 * 1024


def _lane_tile_candidates(h):
    """Divisors of h that are multiples of 128 (descending); fallback [h]."""
    cands = [d for d in range(128, h + 1, 128) if h % d == 0]
    return sorted(cands, reverse=True) if cands else [h]


def _tm_candidates(gen):
    """Token-tile targets per generation (weights re-stream per token tile,
    so bigger tm -> higher arithmetic intensity for prefill)."""
    if gen == "v6":
        return (1024, 512, 256, 128, 64, 32, 16)
    return (512, 256, 128, 64, 32, 16)


def _vmem_estimate(tm, th, d, out_bytes, gate_bytes, use_scratch):
    """Rough per-kernel VMEM footprint: double-buffered pipeline operands +
    accumulator + materialized (tm, 2*th) gating intermediates."""
    w13 = 2 * d * (2 * th) * 2           # fused [W1|W3] slice, 2 buffers, bf16
    w2 = 2 * th * d * 2                  # W2 slice, 2 buffers, bf16
    x_t = 2 * tm * d * 2                 # x token tile, 2 buffers, bf16
    o_t = 2 * tm * d * out_bytes         # output tile, 2 buffers
    acc = tm * d * 4 if use_scratch else 0
    inter = 3 * tm * (2 * th) * gate_bytes   # h1 / h3 / gated intermediates
    bias = 2 * (2 * th) * 4 * 2 + d * 4 * 2
    return w13 + w2 + x_t + o_t + acc + inter + bias


# ----------------------------- kernel ----------------------------------------

def _make_swiglu_kernel(th, gate_dtype, acc_in_out):
    """Fused SwiGLU FFN step for one (token-tile, hidden-tile) grid point.

    x_ref:   (tm, D)  bf16        w13_ref: (D, 2*th) bf16  ([W1 tile | W3 tile])
    b13_ref: (1, 2*th) f32        w2_ref:  (th, D)  bf16   b2_ref: (1, D) f32
    o_ref:   (tm, D)  out dtype   scratch: optional (tm, D) f32 accumulator
    """

    def kernel(x_ref, w13_ref, b13_ref, w2_ref, b2_ref, o_ref, *scratch):
        acc_ref = o_ref if acc_in_out else scratch[0]
        h = pl.program_id(1)

        @pl.when(h == 0)
        def _init():
            acc_ref[...] = jnp.zeros_like(acc_ref)

        x = x_ref[...]
        # One fused MXU matmul against [W1 tile | W3 tile]; f32 accumulation.
        hh = jnp.dot(x, w13_ref[...],
                     preferred_element_type=jnp.float32) + b13_ref[...]
        hh = hh.astype(gate_dtype)          # bf16 gating on v6e/v7x, f32 on v5e
        h1 = hh[:, :th]                     # static, lane-aligned split
        h3 = hh[:, th:]
        gated = (h1 * jax.nn.sigmoid(h1)) * h3
        # Partial w2 projection for this hidden slice; accumulate across h tiles.
        acc_ref[...] += jnp.dot(gated.astype(w2_ref.dtype), w2_ref[...],
                                preferred_element_type=jnp.float32)

        @pl.when(h == pl.num_programs(1) - 1)
        def _finalize():
            # b2 added exactly once.
            if acc_in_out:
                o_ref[...] = o_ref[...] + b2_ref[...]
            else:
                o_ref[...] = (acc_ref[...] + b2_ref[...]).astype(o_ref.dtype)

    return kernel


# ----------------------------- parameter setup -------------------------------

def pack_expert_weights(w1, b1, a1, lb1,
                        w2, b2, a2, lb2,
                        w3, b3, a3, lb3,
                        *, out_dtype=jnp.float32, th=None):
    """Fold LoRA branches (W_eff = W + B @ A), transpose for lane-dense output,
    pick a VMEM-budget-aware hidden tile th and interleave W1/W3 per hidden
    tile so one (D, 2*th) block is [W1 tile | W3 tile].  Pure setup (JAX glue)."""
    h, d = w1.shape          # w1: (hidden, dim)
    assert w3.shape == (h, d) and w2.shape == (d, h)

    w1_eff = (w1 + lb1 @ a1).T            # (D, H)
    w3_eff = (w3 + lb3 @ a3).T            # (D, H)
    w2_eff = (w2 + lb2 @ a2).T            # (H, D)

    gen = _device_generation()
    gate_dtype = jnp.bfloat16 if gen in ("v6", "v7") else jnp.float32
    gate_bytes = jnp.dtype(gate_dtype).itemsize
    out_bytes = jnp.dtype(out_dtype).itemsize
    use_scratch = jnp.dtype(out_dtype) != jnp.dtype(jnp.float32)
    budget = _vmem_limit_bytes() - 2 * 1024 * 1024

    if th is None:
        th = _lane_tile_candidates(h)[-1]
        for tm_target in _tm_candidates(gen):
            found = None
            for cand in _lane_tile_candidates(h):
                if _vmem_estimate(tm_target, cand, d, out_bytes, gate_bytes,
                                  use_scratch) <= budget:
                    found = cand
                    break
            if found is not None:
                th = found
                break
    assert h % th == 0, (h, th)
    nt = h // th

    # Interleave so block h of the (D, 2H) array = [W1 tile h | W3 tile h].
    w13 = jnp.concatenate(
        [w1_eff.reshape(d, nt, th), w3_eff.reshape(d, nt, th)], axis=2
    ).reshape(d, 2 * h).astype(jnp.bfloat16)
    b13 = jnp.concatenate(
        [jnp.asarray(b1, jnp.float32).reshape(1, nt, th),
         jnp.asarray(b3, jnp.float32).reshape(1, nt, th)], axis=2
    ).reshape(1, 2 * h)

    return dict(
        w13=w13, b13=b13,
        w2=w2_eff.astype(jnp.bfloat16),
        b2=jnp.asarray(b2, jnp.float32).reshape(1, d),
        th=int(th), dim=int(d), hidden=int(h),
        gate_dtype=gate_dtype, out_dtype=jnp.dtype(out_dtype),
    )


# ----------------------------- forward ----------------------------------------

def expert_feed_forward(x, packed, *, tm=None):
    """Fused SwiGLU FFN.  x: (T, D) -> (T, D) in packed['out_dtype']."""
    T, D = x.shape
    assert D == packed["dim"]
    H = packed["hidden"]
    th = packed["th"]
    out_dtype = packed["out_dtype"]
    gate_dtype = packed["gate_dtype"]
    out_bytes = jnp.dtype(out_dtype).itemsize
    gate_bytes = jnp.dtype(gate_dtype).itemsize
    acc_in_out = jnp.dtype(out_dtype) == jnp.dtype(jnp.float32)

    gen = _device_generation()
    vmem_limit = _vmem_limit_bytes()
    budget = vmem_limit - 2 * 1024 * 1024

    # Token tile: biggest candidate that fits the VMEM budget with this th.
    T_pad16 = _round_up(T, 16)            # bf16 sublane packing
    if tm is None:
        tm = 16
        for cand in _tm_candidates(gen):
            cand = min(cand, T_pad16)
            if _vmem_estimate(cand, th, D, out_bytes, gate_bytes,
                              not acc_in_out) <= budget:
                tm = cand
                break
    tm = min(tm, T_pad16)
    # v7x has 2 TensorCores: make sure the parallel (token) axis has >= 2 tiles.
    if gen == "v7" and T_pad16 // tm <= 1 and T_pad16 >= 32:
        tm = max(16, _round_up(T_pad16 // 2, 16))

    # TODO(synk): replace wrapper-side pad/slice of ragged T with a masked
    # store of the last token tile (scalar-prefetch T + pltpu.store mask).
    T_pad = _round_up(T, tm)
    x_in = x if T_pad == T else jnp.pad(x, ((0, T_pad - T), (0, 0)))
    x_bf16 = x_in.astype(jnp.bfloat16)

    grid = (T_pad // tm, H // th)

    weight_bytes = (packed["w13"].size + packed["w2"].size) * 2  # bf16
    cost = pl.CostEstimate(
        flops=6 * T_pad * D * H,
        transcendentals=T_pad * H,
        bytes_accessed=(x_bf16.size * 2
                        + grid[0] * weight_bytes          # re-streamed per token tile
                        + packed["b13"].size * 4 + packed["b2"].size * 4
                        + T_pad * D * out_bytes),
    )

    kernel = _make_swiglu_kernel(th, gate_dtype, acc_in_out)
    scratch_shapes = [] if acc_in_out else [pltpu.VMEM((tm, D), jnp.float32)]

    out = pl.pallas_call(
        kernel,
        out_shape=jax.ShapeDtypeStruct((T_pad, D), out_dtype),
        grid_spec=pltpu.PrefetchScalarGridSpec(
            num_scalar_prefetch=0,
            grid=grid,
            in_specs=[
                pl.BlockSpec((tm, D), lambda i, h: (i, 0)),        # x token tile
                pl.BlockSpec((D, 2 * th), lambda i, h: (0, h)),    # [W1|W3] slice
                pl.BlockSpec((1, 2 * th), lambda i, h: (0, h)),    # [b1|b3] slice
                pl.BlockSpec((th, D), lambda i, h: (h, 0)),        # W2 slice
                pl.BlockSpec((1, D), lambda i, h: (0, 0)),         # b2
            ],
            out_specs=pl.BlockSpec((tm, D), lambda i, h: (i, 0)),
            scratch_shapes=scratch_shapes,
        ),
        compiler_params=pltpu.CompilerParams(
            dimension_semantics=("parallel", "arbitrary"),
            vmem_limit_bytes=vmem_limit),
        cost_estimate=cost,
    )(x_bf16, packed["w13"], packed["b13"], packed["w2"], packed["b2"])

    return out if T_pad == T else out[:T]


# ----------------------------- test harness ----------------------------------

def init_lora_linear(key, in_dim, out_dim, lora_rank):
    """Deterministic params for one LoraLinear: base W [out,in], bias [out],
    lora_a [rank,in], lora_b [out,rank]."""
    k_w, k_b, k_a, k_lb = jax.random.split(key, 4)
    scale = 1.0 / jnp.sqrt(in_dim)
    w = jax.random.uniform(k_w, (out_dim, in_dim), jnp.float32, -scale, scale)
    b = jax.random.uniform(k_b, (out_dim,), jnp.float32, -scale, scale)
    a = jax.random.normal(k_a, (lora_rank, in_dim), jnp.float32) * 0.02
    lb = jax.random.normal(k_lb, (out_dim, lora_rank), jnp.float32) * 0.02
    return w, b, a, lb


if __name__ == "__main__":
    # Small shapes consistent with the module (dim -> hidden_dim -> dim SwiGLU).
    T = 8            # tokens (batch * seq flattened)
    DIM = 128        # model dim
    HIDDEN = 256     # hidden_dim
    LORA_RANK = 16   # args.lora_rank

    key = jax.random.PRNGKey(0)
    kx, k1, k2, k3 = jax.random.split(key, 4)

    x = jax.random.normal(kx, (T, DIM), jnp.float32)

    # w1: dim -> hidden, w3: dim -> hidden, w2: hidden -> dim (all LoRA linears).
    w1, b1, a1, lb1 = init_lora_linear(k1, DIM, HIDDEN, LORA_RANK)
    w2, b2, a2, lb2 = init_lora_linear(k2, HIDDEN, DIM, LORA_RANK)
    w3, b3, a3, lb3 = init_lora_linear(k3, DIM, HIDDEN, LORA_RANK)

    packed = pack_expert_weights(w1, b1, a1, lb1,
                                 w2, b2, a2, lb2,
                                 w3, b3, a3, lb3,
                                 out_dtype=x.dtype)

    out = expert_feed_forward(x, packed)
    out = jax.block_until_ready(out)

    # Pure-JAX f32 reference (exact PyTorch forward semantics, two-branch LoRA).
    def lora_lin(x_, w_, b_, a_, lb_):
        return x_ @ w_.T + b_ + (x_ @ a_.T) @ lb_.T

    h1 = lora_lin(x, w1, b1, a1, lb1)
    h3 = lora_lin(x, w3, b3, a3, lb3)
    ref = lora_lin(jax.nn.silu(h1) * h3, w2, b2, a2, lb2)

    assert out.shape == (T, DIM)
    # Loose tolerance: matmul operands (and gating on v6e/v7x) are bf16 in the
    # kernel with f32 accumulation.
    assert jnp.allclose(out, ref, atol=5e-2, rtol=5e-2), (
        float(jnp.max(jnp.abs(out - ref))))
    print("KERNEL_OK")
</pallas_src>

<mosaic_0001>
module attributes {stable_mosaic.version = 11 : i64} {
  func.func @kernel(%arg0: i32, %arg1: i32, %arg2: memref<16x128xbf16, #tpu.memory_space<vmem>>, %arg3: memref<128x512xbf16, #tpu.memory_space<vmem>>, %arg4: memref<1x512xf32, #tpu.memory_space<vmem>>, %arg5: memref<256x128xbf16, #tpu.memory_space<vmem>>, %arg6: memref<1x128xf32, #tpu.memory_space<vmem>>, %arg7: memref<16x128xf32, #tpu.memory_space<vmem>>) attributes {dimension_semantics = [#tpu.dimension_semantics<parallel>, #tpu.dimension_semantics<arbitrary>], iteration_bounds = array<i64: 1, 1>, scalar_prefetch = 0 : i64, scratch_operands = 0 : i64, tpu.core_type = #tpu.core_type<tc>, window_params = [{transform_indices = @transform_0, window_bounds = array<i64: 16, 128>}, {transform_indices = @transform_1, window_bounds = array<i64: 128, 512>}, {transform_indices = @transform_2, window_bounds = array<i64: 1, 512>}, {transform_indices = @transform_3, window_bounds = array<i64: 256, 128>}, {pipeline_mode = #tpu.pipeline_mode<synchronous>, transform_indices = @transform_4, window_bounds = array<i64: 1, 128>}, {transform_indices = @transform_5, window_bounds = array<i64: 16, 128>}]} {
    %c0_i32 = arith.constant 0 : i32
    %0 = arith.cmpi eq, %arg1, %c0_i32 : i32
    %1 = arith.extui %0 : i1 to i32
    %c0_i32_0 = arith.constant 0 : i32
    %2 = arith.cmpi ne, %1, %c0_i32_0 : i32
    scf.if %2 {
      %cst_16 = arith.constant 0.000000e+00 : f32
      %27 = vector.broadcast %cst_16 : f32 to vector<16x128xf32>
      %c0_17 = arith.constant 0 : index
      %c0_18 = arith.constant 0 : index
      %28 = vector.load %arg7[%c0_17, %c0_18] : memref<16x128xf32, #tpu.memory_space<vmem>>, vector<16x128xf32>
      tpu.vector_store %arg7[%c0_17, %c0_18], %27 {strides = array<i32>} : memref<16x128xf32, #tpu.memory_space<vmem>>, vector<16x128xf32>,
    } else {
    }
    %c0 = arith.constant 0 : index
    %c0_1 = arith.constant 0 : index
    %3 = vector.load %arg2[%c0, %c0_1] : memref<16x128xbf16, #tpu.memory_space<vmem>>, vector<16x128xbf16>
    %c0_2 = arith.constant 0 : index
    %c0_3 = arith.constant 0 : index
    %4 = vector.load %arg3[%c0_2, %c0_3] : memref<128x512xbf16, #tpu.memory_space<vmem>>, vector<128x512xbf16>
    %cst = arith.constant dense<0.000000e+00> : vector<16x512xf32>
    %5 = tpu.matmul %3, %4, %cst {dimension_numbers = #tpu.dot_dimension_numbers<[1], [0], [0], [1], [0, 0, 1, 1], [], []>} : vector<16x128xbf16>, vector<128x512xbf16>, vector<16x512xf32> -> vector<16x512xf32>
    %c0_4 = arith.constant 0 : index
    %c0_5 = arith.constant 0 : index
    %6 = vector.load %arg4[%c0_4, %c0_5] : memref<1x512xf32, #tpu.memory_space<vmem>>, vector<1x512xf32>
    %7 = vector.broadcast %6 : vector<1x512xf32> to vector<16x512xf32>
    %8 = arith.addf %5, %7 : vector<16x512xf32>
    %9 = vector.extract_strided_slice %8 {offsets = [0, 0], sizes = [16, 256], strides = [1, 1]} : vector<16x512xf32> to vector<16x256xf32>
    %10 = vector.extract_strided_slice %8 {offsets = [0, 256], sizes = [16, 256], strides = [1, 1]} : vector<16x512xf32> to vector<16x256xf32>
    %11 = arith.negf %9 : vector<16x256xf32>
    %12 = math.exp %11 : vector<16x256xf32>
    %cst_6 = arith.constant 1.000000e+00 : f32
    %13 = vector.broadcast %cst_6 : f32 to vector<16x256xf32>
    %14 = arith.addf %13, %12 : vector<16x256xf32>
    %15 = arith.divf %13, %14 : vector<16x256xf32>
    %16 = arith.mulf %9, %15 : vector<16x256xf32>
    %17 = arith.mulf %16, %10 : vector<16x256xf32>
    %c0_7 = arith.constant 0 : index
    %c0_8 = arith.constant 0 : index
    %18 = vector.load %arg7[%c0_7, %c0_8] : memref<16x128xf32, #tpu.memory_space<vmem>>, vector<16x128xf32>
    %19 = arith.truncf %17 : vector<16x256xf32> to vector<16x256xbf16>
    %c0_9 = arith.constant 0 : index
    %c0_10 = arith.constant 0 : index
    %20 = vector.load %arg5[%c0_9, %c0_10] : memref<256x128xbf16, #tpu.memory_space<vmem>>, vector<256x128xbf16>
    %cst_11 = arith.constant dense<0.000000e+00> : vector<16x128xf32>
    %21 = tpu.matmul %19, %20, %cst_11 {dimension_numbers = #tpu.dot_dimension_numbers<[1], [0], [0], [1], [0, 0, 1, 1], [], []>} : vector<16x256xbf16>, vector<256x128xbf16>, vector<16x128xf32> -> vector<16x128xf32>
    %22 = arith.addf %18, %21 : vector<16x128xf32>
    %c0_12 = arith.constant 0 : index
    %c0_13 = arith.constant 0 : index
    %23 = vector.load %arg7[%c0_12, %c0_13] : memref<16x128xf32, #tpu.memory_space<vmem>>, vector<16x128xf32>
    tpu.vector_store %arg7[%c0_12, %c0_13], %22 {strides = array<i32>} : memref<16x128xf32, #tpu.memory_space<vmem>>, vector<16x128xf32>,
    %c0_i32_14 = arith.constant 0 : i32
    %24 = arith.cmpi eq, %arg1, %c0_i32_14 : i32
    %25 = arith.extui %24 : i1 to i32
    %c0_i32_15 = arith.constant 0 : i32
    %26 = arith.cmpi ne, %25, %c0_i32_15 : i32
    scf.if %26 {
      %c0_16 = arith.constant 0 : index
      %c0_17 = arith.constant 0 : index
      %27 = vector.load %arg7[%c0_16, %c0_17] : memref<16x128xf32, #tpu.memory_space<vmem>>, vector<16x128xf32>
      %c0_18 = arith.constant 0 : index
      %c0_19 = arith.constant 0 : index
      %28 = vector.load %arg6[%c0_18, %c0_19] : memref<1x128xf32, #tpu.memory_space<vmem>>, vector<1x128xf32>
      %29 = vector.broadcast %28 : vector<1x128xf32> to vector<16x128xf32>
      %30 = arith.addf %27, %29 : vector<16x128xf32>
      %c0_20 = arith.constant 0 : index
      %c0_21 = arith.constant 0 : index
      %31 = vector.load %arg7[%c0_20, %c0_21] : memref<16x128xf32, #tpu.memory_space<vmem>>, vector<16x128xf32>
      tpu.vector_store %arg7[%c0_20, %c0_21], %30 {strides = array<i32>} : memref<16x128xf32, #tpu.memory_space<vmem>>, vector<16x128xf32>,
    } else {
    }
    return
  }
  func.func @transform_0(%arg0: i32, %arg1: i32) -> (i32, i32) {
    %c0_i32 = arith.constant 0 : i32
    %c0_i32_0 = arith.constant 0 : i32
    return %arg0, %c0_i32 : i32, i32
  }
  func.func @transform_1(%arg0: i32, %arg1: i32) -> (i32, i32) {
    %c0_i32 = arith.constant 0 : i32
    %c0_i32_0 = arith.constant 0 : i32
    return %c0_i32, %arg1 : i32, i32
  }
  func.func @transform_2(%arg0: i32, %arg1: i32) -> (i32, i32) {
    %c0_i32 = arith.constant 0 : i32
    %c0_i32_0 = arith.constant 0 : i32
    return %c0_i32, %arg1 : i32, i32
  }
  func.func @transform_3(%arg0: i32, %arg1: i32) -> (i32, i32) {
    %c0_i32 = arith.constant 0 : i32
    %c0_i32_0 = arith.constant 0 : i32
    return %arg1, %c0_i32 : i32, i32
  }
  func.func @transform_4(%arg0: i32, %arg1: i32) -> (i32, i32) {
    %c0_i32 = arith.constant 0 : i32
    %c0_i32_0 = arith.constant 0 : i32
    %c0_i32_1 = arith.constant 0 : i32
    return %c0_i32, %c0_i32_0 : i32, i32
  }
  func.func @transform_5(%arg0: i32, %arg1: i32) -> (i32, i32) {
    %c0_i32 = arith.constant 0 : i32
    %c0_i32_0 = arith.constant 0 : i32
    return %arg0, %c0_i32 : i32, i32
  }
}

</mosaic_0001>

<llo_original>
// kernel: tpu_custom_call.1
$region0: #{tpu_custom_call.1}
  #allocation0 [shape = 'u32[]', space=smem, size = 0x4, offset = 0x4, fixed_abs, tag = 'smem constant byte address 0x4 - core index']
  #allocation1 [shape = 'u32[144,128]{1,0:T(1,128)}', space=vmem, size = 0x12000, scoped, tag = 'internal scratch']
  %s0 = inlined_call_operand.hbm [shape: bf16[16,128], index: 0, kind: input, shape index: {}]
  %s1 = inlined_call_operand.hbm [shape: bf16[128,512], index: 1, kind: input, shape index: {}]
  %s2 = inlined_call_operand.hbm [shape: f32[1,512], index: 2, kind: input, shape index: {}]
  %s3 = inlined_call_operand.hbm [shape: bf16[256,128], index: 3, kind: input, shape index: {}]
  %s4 = inlined_call_operand.vmem [shape: f32[1,128], index: 4, kind: input, shape index: {}]
  %s5 = inlined_call_operand.hbm [shape: f32[16,128], index: 5, kind: output, shape index: {}]
  %s6 = sld [smem:[#allocation0]]
  $region54: #{tpu_custom_call.1} parent=0
    _
  %s8 = ssub.s32 1, %s6
  %s9 = scalar_select 0, %s8, %s6
  $region1: #{tpu_custom_call.1} parent=0
    #allocation2 [shape = 'u8[4096]{0}', space=vmem, size = 0x1000, scoped, tag = 'input window, operand 0, single buffered']
    #allocation3 [shape = 's32[1]{0}', space=sflag, size = 0x4, scoped, tag = 'scoped memory for tpu_custom_call.1']
    #allocation4 [shape = 's32[1]{0}', space=sflag, size = 0x4, scoped, tag = 'scoped memory for tpu_custom_call.1']
    #allocation5 [shape = 'u8[131072]{0}', space=vmem, size = 0x20000, scoped, tag = 'input window, operand 1, single buffered']
    #allocation6 [shape = 's32[1]{0}', space=sflag, size = 0x4, scoped, tag = 'scoped memory for tpu_custom_call.1']
    #allocation7 [shape = 'u8[2048]{0}', space=vmem, size = 0x800, scoped, tag = 'input window, operand 2, single buffered']
    #allocation8 [shape = 'u8[65536]{0}', space=vmem, size = 0x10000, scoped, tag = 'input window, operand 3, single buffered']
    #allocation9 [shape = 's32[1]{0}', space=sflag, size = 0x4, scoped, tag = 'scoped memory for tpu_custom_call.1']
    #allocation10 [shape = 'u8[8192]{0}', space=vmem, size = 0x2000, scoped, tag = 'output window, operand 0, single buffered']
    %10 = vsyncpa [#allocation3], 0
    %11 = vsyncpa [#allocation6], 0
    %12 = vsyncpa [#allocation9], 0
    %13 = vsyncpa [#allocation4], 0
    // Predicated region
    $region2: #{tpu_custom_call.1} parent=1 // pred_check
      _
    $region3: #{tpu_custom_call.1} parent=1 // pred_check_branch
      %15 = sbr.rel (0) target = $region5
    $region4: #{tpu_custom_call.1} parent=1 // pred_region
      %s17 = ssub.s32 128, 128
      %18 = vsyncadd [#allocation3], %s17
      %s19 = sshll.u32 [#allocation2], 4
      %s20 = int_to_ptr.vmem [resolvable:$true] %s19
      %25 = dma.hbm_to_vmem [thread:$0]  %s0, 128, %s20, [#allocation3], 64, 64, 4
    $region5: #{tpu_custom_call.1} parent=1 // pred_fallthru
      _
    // Predicated region
    $region6: #{tpu_custom_call.1} parent=1 // pred_check
      _
    $region7: #{tpu_custom_call.1} parent=1 // pred_check_branch
      %27 = sbr.rel (0) target = $region9
    $region8: #{tpu_custom_call.1} parent=1 // pred_region
      %s29 = ssub.s32 4096, 4096
      %30 = vsyncadd [#allocation6], %s29
      %s31 = sshll.u32 [#allocation5], 4
      %s32 = int_to_ptr.vmem [resolvable:$true] %s31
      %37 = dma.hbm_to_vmem [thread:$0]  %s1, 4096, %s32, [#allocation6], 256, 256, 16
    $region9: #{tpu_custom_call.1} parent=1 // pred_fallthru
      _
    // Predicated region
    $region10: #{tpu_custom_call.1} parent=1 // pred_check
      _
    $region11: #{tpu_custom_call.1} parent=1 // pred_check_branch
      %39 = sbr.rel (0) target = $region13
    $region12: #{tpu_custom_call.1} parent=1 // pred_region
      %s41 = ssub.s32 64, 64
      %42 = vsyncadd [#allocation6], %s41
      %s44 = sshll.u32 [#allocation7], 4
      %s45 = int_to_ptr.vmem [resolvable:$true] %s44
      %47 = dma.hbm_to_vmem [thread:$0]  %s2, 64, %s45, [#allocation6]
    $region13: #{tpu_custom_call.1} parent=1 // pred_fallthru
      _
    // Predicated region
    $region14: #{tpu_custom_call.1} parent=1 // pred_check
      _
    $region15: #{tpu_custom_call.1} parent=1 // pred_check_branch
      %49 = sbr.rel (0) target = $region17
    $region16: #{tpu_custom_call.1} parent=1 // pred_region
      %s51 = ssub.s32 2048, 2048
      %52 = vsyncadd [#allocation9], %s51
      %s53 = sshll.u32 [#allocation8], 4
      %s54 = int_to_ptr.vmem [resolvable:$true] %s53
      %59 = dma.hbm_to_vmem [thread:$0]  %s3, 2048, %s54, [#allocation9], 64, 64, 4
    $region17: #{tpu_custom_call.1} parent=1 // pred_fallthru
      _
    // Predicated region
    $region18: #{tpu_custom_call.1} parent=1 // pred_check
      _
    $region19: #{tpu_custom_call.1} parent=1 // pred_check_branch
      %61 = sbr.rel (0) target = $region21
    $region20: #{tpu_custom_call.1} parent=1 // pred_region
      _
    $region21: #{tpu_custom_call.1} parent=1 // pred_fallthru
      _
    // Predicated region
    $region22: #{tpu_custom_call.1} parent=1 // pred_check
      _
    $region23: #{tpu_custom_call.1} parent=1 // pred_check_branch
      %63 = sbr.rel (0) target = $region25
    $region24: #{tpu_custom_call.1} parent=1 // pred_region
      %64 = dma.done [#allocation3], 128
    $region25: #{tpu_custom_call.1} parent=1 // pred_fallthru
      _
    // Predicated region
    $region26: #{tpu_custom_call.1} parent=1 // pred_check
      _
    $region27: #{tpu_custom_call.1} parent=1 // pred_check_branch
      %66 = sbr.rel (0) target = $region29
    $region28: #{tpu_custom_call.1} parent=1 // pred_region
      %67 = dma.done [#allocation6], 4096
    $region29: #{tpu_custom_call.1} parent=1 // pred_fallthru
      _
    // Predicated region
    $region30: #{tpu_custom_call.1} parent=1 // pred_check
      _
    $region31: #{tpu_custom_call.1} parent=1 // pred_check_branch
      %69 = sbr.rel (0) target = $region33
    $region32: #{tpu_custom_call.1} parent=1 // pred_region
      %70 = dma.done [#allocation6], 64
    $region33: #{tpu_custom_call.1} parent=1 // pred_fallthru
      _
    // Predicated region
    $region34: #{tpu_custom_call.1} parent=1 // pred_check
      _
    $region35: #{tpu_custom_call.1} parent=1 // pred_check_branch
      %72 = sbr.rel (0) target = $region37
    $region36: #{tpu_custom_call.1} parent=1 // pred_region
      %73 = dma.done [#allocation9], 2048
    $region37: #{tpu_custom_call.1} parent=1 // pred_fallthru
      _
    %p75 = scmp.eq.s32.totalorder 0, 0
    // Predicated region
    $region38: #{tpu_custom_call.1} parent=1 // pred_check
      %p76 = pneg %p75
    $region39: #{tpu_custom_call.1} parent=1 // pred_check_branch
      %78 = sbr.rel (%p76) target = $region41
    $region40: #{tpu_custom_call.1} parent=1 // pred_region
      %79 = vst [vmem:[#allocation10] sm:$0xff] 0.0
      %80 = vst [vmem:[#allocation10 + $0x8] sm:$0xff] 0.0
    $region41: #{tpu_custom_call.1} parent=1 // pred_fallthru
      _
    %v81 = vld [vmem:[#allocation2] sm:$0xf]
    %v82 = vld [vmem:[#allocation2 + $0x4] sm:$0xf]
    %v83 = vld [vmem:[#allocation5] sm:$0xff]
    %v84 = vld [vmem:[#allocation5 + $0x8] sm:$0xff]
    %v85 = vld [vmem:[#allocation5 + $0x10] sm:$0xff]
    %v86 = vld [vmem:[#allocation5 + $0x18] sm:$0xff]
    %v87 = vld [vmem:[#allocation5 + $0x20] sm:$0xff]
    %v88 = vld [vmem:[#allocation5 + $0x28] sm:$0xff]
    %v89 = vld [vmem:[#allocation5 + $0x30] sm:$0xff]
    %v90 = vld [vmem:[#allocation5 + $0x38] sm:$0xff]
    %v91 = vld [vmem:[#allocation5 + $0x40] sm:$0xff]
    %v92 = vld [vmem:[#allocation5 + $0x48] sm:$0xff]
    %v93 = vld [vmem:[#allocation5 + $0x50] sm:$0xff]
    %v94 = vld [vmem:[#allocation5 + $0x58] sm:$0xff]
    %v95 = vld [vmem:[#allocation5 + $0x60] sm:$0xff]
    %v96 = vld [vmem:[#allocation5 + $0x68] sm:$0xff]
    %v97 = vld [vmem:[#allocation5 + $0x70] sm:$0xff]
    %v98 = vld [vmem:[#allocation5 + $0x78] sm:$0xff]
    %v99 = vld [vmem:[#allocation5 + $0x80] sm:$0xff]
    %v100 = vld [vmem:[#allocation5 + $0x88] sm:$0xff]
    %v101 = vld [vmem:[#allocation5 + $0x90] sm:$0xff]
    %v102 = vld [vmem:[#allocation5 + $0x98] sm:$0xff]
    %v103 = vld [vmem:[#allocation5 + $0xa0] sm:$0xff]
    %v104 = vld [vmem:[#allocation5 + $0xa8] sm:$0xff]
    %v105 = vld [vmem:[#allocation5 + $0xb0] sm:$0xff]
    %v106 = vld [vmem:[#allocation5 + $0xb8] sm:$0xff]
    %v107 = vld [vmem:[#allocation5 + $0xc0] sm:$0xff]
    %v108 = vld [vmem:[#allocation5 + $0xc8] sm:$0xff]
    %v109 = vld [vmem:[#allocation5 + $0xd0] sm:$0xff]
    %v110 = vld [vmem:[#allocation5 + $0xd8] sm:$0xff]
    %v111 = vld [vmem:[#allocation5 + $0xe0] sm:$0xff]
    %v112 = vld [vmem:[#allocation5 + $0xe8] sm:$0xff]
    %v113 = vld [vmem:[#allocation5 + $0xf0] sm:$0xff]
    %v114 = vld [vmem:[#allocation5 + $0xf8] sm:$0xff]
    %v115 = vld [vmem:[#allocation7] sm:$0xf]
    %v117 = vlaneseq
    %v118 = vshrl.u32 %v117, 7
    %v119 = vsub.s32 0, %v118
    %v120 = vrot.slane %v115, %v119
    %v121 = vlaneseq
    %v122 = vshrl.u32 %v121, 7
    %v123 = vsub.s32 1, %v122
    %v124 = vrot.slane %v115, %v123
    %v125 = vlaneseq
    %v126 = vshrl.u32 %v125, 7
    %v127 = vsub.s32 2, %v126
    %v128 = vrot.slane %v115, %v127
    %v129 = vlaneseq
    %v130 = vshrl.u32 %v129, 7
    %v131 = vsub.s32 3, %v130
    %v132 = vrot.slane %v115, %v131
    %v139 = vunpack.c.l.b16 %v81
    %v140 = vunpack.c.l.b16 %v82
    %v141 = vpack.c.b16 %v140, %v139
    %v175 = vunpack.c.l.b16 %v83
    %v176 = vunpack.c.h.b16 %v83
    %v177 = vunpack.c.l.b16 %v84
    %v178 = vunpack.c.h.b16 %v84
    %v179 = vunpack.c.l.b16 %v85
    %v180 = vunpack.c.h.b16 %v85
    %v181 = vunpack.c.l.b16 %v86
    %v182 = vunpack.c.h.b16 %v86
    %v183 = vunpack.c.l.b16 %v87
    %v184 = vunpack.c.h.b16 %v87
    %v185 = vunpack.c.l.b16 %v88
    %v186 = vunpack.c.h.b16 %v88
    %v187 = vunpack.c.l.b16 %v89
    %v188 = vunpack.c.h.b16 %v89
    %v189 = vunpack.c.l.b16 %v90
    %v190 = vunpack.c.h.b16 %v90
    %v191 = vunpack.c.l.b16 %v91
    %v192 = vunpack.c.h.b16 %v91
    %v193 = vunpack.c.l.b16 %v92
    %v194 = vunpack.c.h.b16 %v92
    %v195 = vunpack.c.l.b16 %v93
    %v196 = vunpack.c.h.b16 %v93
    %v197 = vunpack.c.l.b16 %v94
    %v198 = vunpack.c.h.b16 %v94
    %v199 = vunpack.c.l.b16 %v95
    %v200 = vunpack.c.h.b16 %v95
    %v201 = vunpack.c.l.b16 %v96
    %v202 = vunpack.c.h.b16 %v96
    %v203 = vunpack.c.l.b16 %v97
    %v204 = vunpack.c.h.b16 %v97
    %v205 = vunpack.c.l.b16 %v98
    %v206 = vunpack.c.h.b16 %v98
    %v207 = vunpack.c.l.b16 %v99
    %v208 = vunpack.c.h.b16 %v99
    %v209 = vunpack.c.l.b16 %v100
    %v210 = vunpack.c.h.b16 %v100
    %v211 = vunpack.c.l.b16 %v101
    %v212 = vunpack.c.h.b16 %v101
    %v213 = vunpack.c.l.b16 %v102
    %v214 = vunpack.c.h.b16 %v102
    %v215 = vunpack.c.l.b16 %v103
    %v216 = vunpack.c.h.b16 %v103
    %v217 = vunpack.c.l.b16 %v104
    %v218 = vunpack.c.h.b16 %v104
    %v219 = vunpack.c.l.b16 %v105
    %v220 = vunpack.c.h.b16 %v105
    %v221 = vunpack.c.l.b16 %v106
    %v222 = vunpack.c.h.b16 %v106
    %v223 = vunpack.c.l.b16 %v107
    %v224 = vunpack.c.h.b16 %v107
    %v225 = vunpack.c.l.b16 %v108
    %v226 = vunpack.c.h.b16 %v108
    %v227 = vunpack.c.l.b16 %v109
    %v228 = vunpack.c.h.b16 %v109
    %v229 = vunpack.c.l.b16 %v110
    %v230 = vunpack.c.h.b16 %v110
    %v231 = vunpack.c.l.b16 %v111
    %v232 = vunpack.c.h.b16 %v111
    %v233 = vunpack.c.l.b16 %v112
    %v234 = vunpack.c.h.b16 %v112
    %v235 = vunpack.c.l.b16 %v113
    %v236 = vunpack.c.h.b16 %v113
    %v237 = vunpack.c.l.b16 %v114
    %v238 = vunpack.c.h.b16 %v114
    %v239 = vpack.c.b16 %v179, %v175
    %v240 = vpack.c.b16 %v180, %v176
    %v241 = vpack.c.b16 %v181, %v177
    %v242 = vpack.c.b16 %v182, %v178
    %v243 = vpack.c.b16 %v187, %v183
    %v244 = vpack.c.b16 %v188, %v184
    %v245 = vpack.c.b16 %v189, %v185
    %v246 = vpack.c.b16 %v190, %v186
    %v247 = vpack.c.b16 %v195, %v191
    %v248 = vpack.c.b16 %v196, %v192
    %v249 = vpack.c.b16 %v197, %v193
    %v250 = vpack.c.b16 %v198, %v194
    %v251 = vpack.c.b16 %v203, %v199
    %v252 = vpack.c.b16 %v204, %v200
    %v253 = vpack.c.b16 %v205, %v201
    %v254 = vpack.c.b16 %v206, %v202
    %v255 = vpack.c.b16 %v211, %v207
    %v256 = vpack.c.b16 %v212, %v208
    %v257 = vpack.c.b16 %v213, %v209
    %v258 = vpack.c.b16 %v214, %v210
    %v259 = vpack.c.b16 %v219, %v215
    %v260 = vpack.c.b16 %v220, %v216
    %v261 = vpack.c.b16 %v221, %v217
    %v262 = vpack.c.b16 %v222, %v218
    %v263 = vpack.c.b16 %v227, %v223
    %v264 = vpack.c.b16 %v228, %v224
    %v265 = vpack.c.b16 %v229, %v225
    %v266 = vpack.c.b16 %v230, %v226
    %v267 = vpack.c.b16 %v235, %v231
    %v268 = vpack.c.b16 %v236, %v232
    %v269 = vpack.c.b16 %v237, %v233
    %v270 = vpack.c.b16 %v238, %v234
    %303 = vmatprep.subr.bf16.mxu0 %v268
    %304 = vmatpush1.bf16.msra.mxu0 %v267
    %305 = vmatprep.subr.bf16.mxu0 %v264
    %306 = vmatpush1.bf16.msra.mxu0 %v263
    %307 = vmatprep.subr.bf16.mxu0 %v260
    %308 = vmatpush1.bf16.msra.mxu0 %v259
    %309 = vmatprep.subr.bf16.mxu0 %v256
    %310 = vmatpush1.bf16.msra.mxu0 %v255
    %311 = vmatprep.subr.bf16.mxu0 %v252
    %312 = vmatpush1.bf16.msra.mxu0 %v251
    %313 = vmatprep.subr.bf16.mxu0 %v248
    %314 = vmatpush1.bf16.msra.mxu0 %v247
    %315 = vmatprep.subr.bf16.mxu0 %v244
    %316 = vmatpush1.bf16.msra.mxu0 %v243
    %317 = vmatprep.subr.bf16.mxu0 %v240
    %318 = vmatpush1.bf16.msra.mxu0 %v239
    %319 = vmatprep.subr.bf16.mxu0 0
    %320 = vmatpush2.bf16.msra.mxu0 0
    %321 = vmatprep.subr.bf16.mxu0 0
    %322 = vmatpush2.bf16.msra.mxu0 0
    %323 = vmatprep.subr.bf16.mxu0 0
    %324 = vmatpush2.bf16.msra.mxu0 0
    %325 = vmatprep.subr.bf16.mxu0 0
    %326 = vmatpush2.bf16.msra.mxu0 0
    %327 = vmatprep.subr.bf16.mxu0 0
    %328 = vmatpush2.bf16.msra.mxu0 0
    %329 = vmatprep.subr.bf16.mxu0 0
    %330 = vmatpush2.bf16.msra.mxu0 0
    %331 = vmatprep.subr.bf16.mxu0 0
    %332 = vmatpush2.bf16.msra.mxu0 0
    %333 = vmatprep.subr.bf16.mxu0 0
    %334 = vmatpush2.bf16.msra.mxu0 0
    %335 = vmatprep.mubr.bf16.mxu0 0
    %336 = vmatmul.mubr.bf16.gmra.mxu0 %v141
    %v337 = vpop.f32.mrf.mxu0
    %v338 = vadd.f32 %v120, %v337
    %v339 = vpop.f32.mrf.mxu0
    %v340 = vadd.f32 %v124, %v339
    %v341 = vpop.f32.mrf.mxu0
    %v342 = vadd.f32 %v120, %v341
    %v343 = vpop.f32.mrf.mxu0
    %v344 = vadd.f32 %v124, %v343
    %345 = vdwg.mxu0
    %346 = vmatprep.subr.bf16.mxu0 %v270
    %347 = vmatpush1.bf16.msra.mxu0 %v269
    %348 = vmatprep.subr.bf16.mxu0 %v266
    %349 = vmatpush1.bf16.msra.mxu0 %v265
    %350 = vmatprep.subr.bf16.mxu0 %v262
    %351 = vmatpush1.bf16.msra.mxu0 %v261
    %352 = vmatprep.subr.bf16.mxu0 %v258
    %353 = vmatpush1.bf16.msra.mxu0 %v257
    %354 = vmatprep.subr.bf16.mxu0 %v254
    %355 = vmatpush1.bf16.msra.mxu0 %v253
    %356 = vmatprep.subr.bf16.mxu0 %v250
    %357 = vmatpush1.bf16.msra.mxu0 %v249
    %358 = vmatprep.subr.bf16.mxu0 %v246
    %359 = vmatpush1.bf16.msra.mxu0 %v245
    %360 = vmatprep.subr.bf16.mxu0 %v242
    %361 = vmatpush1.bf16.msra.mxu0 %v241
    %362 = vmatprep.subr.bf16.mxu0 0
    %363 = vmatpush2.bf16.msra.mxu0 0
    %364 = vmatprep.subr.bf16.mxu0 0
    %365 = vmatpush2.bf16.msra.mxu0 0
    %366 = vmatprep.subr.bf16.mxu0 0
    %367 = vmatpush2.bf16.msra.mxu0 0
    %368 = vmatprep.subr.bf16.mxu0 0
    %369 = vmatpush2.bf16.msra.mxu0 0
    %370 = vmatprep.subr.bf16.mxu0 0
    %371 = vmatpush2.bf16.msra.mxu0 0
    %372 = vmatprep.subr.bf16.mxu0 0
    %373 = vmatpush2.bf16.msra.mxu0 0
    %374 = vmatprep.subr.bf16.mxu0 0
    %375 = vmatpush2.bf16.msra.mxu0 0
    %376 = vmatprep.subr.bf16.mxu0 0
    %377 = vmatpush2.bf16.msra.mxu0 0
    %378 = vmatprep.mubr.bf16.mxu0 0
    %379 = vmatmul.mubr.bf16.gmra.mxu0 %v141
    %v380 = vpop.f32.mrf.mxu0
    %v381 = vadd.f32 %v128, %v380
    %v382 = vpop.f32.mrf.mxu0
    %v383 = vadd.f32 %v132, %v382
    %v384 = vpop.f32.mrf.mxu0
    %v385 = vadd.f32 %v128, %v384
    %v386 = vpop.f32.mrf.mxu0
    %v387 = vadd.f32 %v132, %v386
    %388 = vdwg.mxu0
    %v389 = vxor.u32 %v338, 2147483648
    %v390 = vxor.u32 %v340, 2147483648
    %v391 = vxor.u32 %v342, 2147483648
    %v392 = vxor.u32 %v344, 2147483648
    %v393 = vmul.f32 %v389, 1.442695
    %v394 = vpow.pop %v393
    %v395 = vmul.f32 %v390, 1.442695
    %v396 = vpow.pop %v395
    %v397 = vmul.f32 %v391, 1.442695
    %v398 = vpow.pop %v397
    %v399 = vmul.f32 %v392, 1.442695
    %v400 = vpow.pop %v399
    %v401 = vadd.f32 %v394, 1.0
    %v402 = vadd.f32 %v396, 1.0
    %v403 = vadd.f32 %v398, 1.0
    %v404 = vadd.f32 %v400, 1.0
    %v405 = vrcp.pop %v401
    %v406 = vmul.f32 1.0, %v405
    %v407 = vrcp.pop %v402
    %v408 = vmul.f32 1.0, %v407
    %v409 = vrcp.pop %v403
    %v410 = vmul.f32 1.0, %v409
    %v411 = vrcp.pop %v404
    %v412 = vmul.f32 1.0, %v411
    %v413 = vmul.f32 %v338, %v406
    %v414 = vmul.f32 %v340, %v408
    %v415 = vmul.f32 %v342, %v410
    %v416 = vmul.f32 %v344, %v412
    %v417 = vmul.f32 %v413, %v381
    %v418 = vmul.f32 %v414, %v383
    %v419 = vmul.f32 %v415, %v385
    %v420 = vmul.f32 %v416, %v387
    %v421 = vld [vmem:[#allocation10] sm:$0xff]
    %v422 = vld [vmem:[#allocation10 + $0x8] sm:$0xff]
    %v423 = vpack.c.bf16 %v419, %v417
    %v424 = vpack.c.bf16 %v420, %v418
    %v425 = vld [vmem:[#allocation8] sm:$0xf]
    %v426 = vld [vmem:[#allocation8 + $0x4] sm:$0xf]
    %v427 = vld [vmem:[#allocation8 + $0x8] sm:$0xf]
    %v428 = vld [vmem:[#allocation8 + $0xc] sm:$0xf]
    %v429 = vld [vmem:[#allocation8 + $0x10] sm:$0xf]
    %v430 = vld [vmem:[#allocation8 + $0x14] sm:$0xf]
    %v431 = vld [vmem:[#allocation8 + $0x18] sm:$0xf]
    %v432 = vld [vmem:[#allocation8 + $0x1c] sm:$0xf]
    %v433 = vld [vmem:[#allocation8 + $0x20] sm:$0xf]
    %v434 = vld [vmem:[#allocation8 + $0x24] sm:$0xf]
    %v435 = vld [vmem:[#allocation8 + $0x28] sm:$0xf]
    %v436 = vld [vmem:[#allocation8 + $0x2c] sm:$0xf]
    %v437 = vld [vmem:[#allocation8 + $0x30] sm:$0xf]
    %v438 = vld [vmem:[#allocation8 + $0x34] sm:$0xf]
    %v439 = vld [vmem:[#allocation8 + $0x38] sm:$0xf]
    %v440 = vld [vmem:[#allocation8 + $0x3c] sm:$0xf]
    %v441 = vld [vmem:[#allocation8 + $0x40] sm:$0xf]
    %v442 = vld [vmem:[#allocation8 + $0x44] sm:$0xf]
    %v443 = vld [vmem:[#allocation8 + $0x48] sm:$0xf]
    %v444 = vld [vmem:[#allocation8 + $0x4c] sm:$0xf]
    %v445 = vld [vmem:[#allocation8 + $0x50] sm:$0xf]
    %v446 = vld [vmem:[#allocation8 + $0x54] sm:$0xf]
    %v447 = vld [vmem:[#allocation8 + $0x58] sm:$0xf]
    %v448 = vld [vmem:[#allocation8 + $0x5c] sm:$0xf]
    %v449 = vld [vmem:[#allocation8 + $0x60] sm:$0xf]
    %v450 = vld [vmem:[#allocation8 + $0x64] sm:$0xf]
    %v451 = vld [vmem:[#allocation8 + $0x68] sm:$0xf]
    %v452 = vld [vmem:[#allocation8 + $0x6c] sm:$0xf]
    %v453 = vld [vmem:[#allocation8 + $0x70] sm:$0xf]
    %v454 = vld [vmem:[#allocation8 + $0x74] sm:$0xf]
    %v455 = vld [vmem:[#allocation8 + $0x78] sm:$0xf]
    %v456 = vld [vmem:[#allocation8 + $0x7c] sm:$0xf]
    %v489 = vunpack.c.l.b16 %v425
    %v490 = vunpack.c.l.b16 %v426
    %v491 = vunpack.c.l.b16 %v427
    %v492 = vunpack.c.l.b16 %v428
    %v493 = vunpack.c.l.b16 %v429
    %v494 = vunpack.c.l.b16 %v430
    %v495 = vunpack.c.l.b16 %v431
    %v496 = vunpack.c.l.b16 %v432
    %v497 = vunpack.c.l.b16 %v433
    %v498 = vunpack.c.l.b16 %v434
    %v499 = vunpack.c.l.b16 %v435
    %v500 = vunpack.c.l.b16 %v436
    %v501 = vunpack.c.l.b16 %v437
    %v502 = vunpack.c.l.b16 %v438
    %v503 = vunpack.c.l.b16 %v439
    %v504 = vunpack.c.l.b16 %v440
    %v505 = vunpack.c.l.b16 %v441
    %v506 = vunpack.c.l.b16 %v442
    %v507 = vunpack.c.l.b16 %v443
    %v508 = vunpack.c.l.b16 %v444
    %v509 = vunpack.c.l.b16 %v445
    %v510 = vunpack.c.l.b16 %v446
    %v511 = vunpack.c.l.b16 %v447
    %v512 = vunpack.c.l.b16 %v448
    %v513 = vunpack.c.l.b16 %v449
    %v514 = vunpack.c.l.b16 %v450
    %v515 = vunpack.c.l.b16 %v451
    %v516 = vunpack.c.l.b16 %v452
    %v517 = vunpack.c.l.b16 %v453
    %v518 = vunpack.c.l.b16 %v454
    %v519 = vunpack.c.l.b16 %v455
    %v520 = vunpack.c.l.b16 %v456
    %v521 = vpack.c.b16 %v490, %v489
    %v522 = vpack.c.b16 %v492, %v491
    %v523 = vpack.c.b16 %v494, %v493
    %v524 = vpack.c.b16 %v496, %v495
    %v525 = vpack.c.b16 %v498, %v497
    %v526 = vpack.c.b16 %v500, %v499
    %v527 = vpack.c.b16 %v502, %v501
    %v528 = vpack.c.b16 %v504, %v503
    %v529 = vpack.c.b16 %v506, %v505
    %v530 = vpack.c.b16 %v508, %v507
    %v531 = vpack.c.b16 %v510, %v509
    %v532 = vpack.c.b16 %v512, %v511
    %v533 = vpack.c.b16 %v514, %v513
    %v534 = vpack.c.b16 %v516, %v515
    %v535 = vpack.c.b16 %v518, %v517
    %v536 = vpack.c.b16 %v520, %v519
    %553 = vmatprep.subr.bf16.mxu0 0
    %554 = vmatpush1.bf16.msra.mxu0 %v528
    %555 = vmatprep.subr.bf16.mxu0 0
    %556 = vmatpush1.bf16.msra.mxu0 %v527
    %557 = vmatprep.subr.bf16.mxu0 0
    %558 = vmatpush1.bf16.msra.mxu0 %v526
    %559 = vmatprep.subr.bf16.mxu0 0
    %560 = vmatpush1.bf16.msra.mxu0 %v525
    %561 = vmatprep.subr.bf16.mxu0 0
    %562 = vmatpush1.bf16.msra.mxu0 %v524
    %563 = vmatprep.subr.bf16.mxu0 0
    %564 = vmatpush1.bf16.msra.mxu0 %v523
    %565 = vmatprep.subr.bf16.mxu0 0
    %566 = vmatpush1.bf16.msra.mxu0 %v522
    %567 = vmatprep.subr.bf16.mxu0 0
    %568 = vmatpush1.bf16.msra.mxu0 %v521
    %569 = vmatprep.subr.bf16.mxu0 0
    %570 = vmatpush2.bf16.msra.mxu0 %v536
    %571 = vmatprep.subr.bf16.mxu0 0
    %572 = vmatpush2.bf16.msra.mxu0 %v535
    %573 = vmatprep.subr.bf16.mxu0 0
    %574 = vmatpush2.bf16.msra.mxu0 %v534
    %575 = vmatprep.subr.bf16.mxu0 0
    %576 = vmatpush2.bf16.msra.mxu0 %v533
    %577 = vmatprep.subr.bf16.mxu0 0
    %578 = vmatpush2.bf16.msra.mxu0 %v532
    %579 = vmatprep.subr.bf16.mxu0 0
    %580 = vmatpush2.bf16.msra.mxu0 %v531
    %581 = vmatprep.subr.bf16.mxu0 0
    %582 = vmatpush2.bf16.msra.mxu0 %v530
    %583 = vmatprep.subr.bf16.mxu0 0
    %584 = vmatpush2.bf16.msra.mxu0 %v529
    %585 = vmatprep.mubr.bf16.mxu0 %v424
    %586 = vmatmul.mubr.bf16.gmra.mxu0 %v423
    %v587 = vpop.f32.mrf.mxu0
    %v588 = vadd.f32 0.0, %v587
    %v589 = vpop.f32.mrf.mxu0
    %v590 = vpop.f32.mrf.mxu0
    %v591 = vadd.f32 0.0, %v590
    %v592 = vpop.f32.mrf.mxu0
    %593 = vdwg.mxu0
    %v594 = vadd.f32 %v421, %v588
    %v595 = vadd.f32 %v422, %v591
    %596 = vst [vmem:[#allocation10] sm:$0xff] %v594
    %597 = vst [vmem:[#allocation10 + $0x8] sm:$0xff] %v595
    // Predicated region
    $region42: #{tpu_custom_call.1} parent=1 // pred_check
      %p598 = pneg %p75
    $region43: #{tpu_custom_call.1} parent=1 // pred_check_branch
      %600 = sbr.rel (%p598) target = $region45
    $region44: #{tpu_custom_call.1} parent=1 // pred_region
      %v601 = vld [vmem:[#allocation10] sm:$0xff]
      %v602 = vld [vmem:[#allocation10 + $0x8] sm:$0xff]
      %v603 = vld [vmem:[%s4] sm:$0x1]
      %v605 = vlaneseq
      %v606 = vshrl.u32 %v605, 7
      %v607 = vsub.s32 0, %v606
      %v608 = vrot.slane %v603, %v607
      %v610 = vadd.f32 %v601, %v608
      %v611 = vadd.f32 %v602, %v608
      %612 = vst [vmem:[#allocation10] sm:$0xff] %v610
      %613 = vst [vmem:[#allocation10 + $0x8] sm:$0xff] %v611
    $region45: #{tpu_custom_call.1} parent=1 // pred_fallthru
      _
    // Predicated region
    $region46: #{tpu_custom_call.1} parent=1 // pred_check
      _
    $region47: #{tpu_custom_call.1} parent=1 // pred_check_branch
      %615 = sbr.rel (0) target = $region49
    $region48: #{tpu_custom_call.1} parent=1 // pred_region
      %s617 = ssub.s32 256, 256
      %618 = vsyncadd [#allocation4], %s617
      %s619 = sshll.u32 [#allocation10], 4
      %s620 = int_to_ptr.vmem [resolvable:$true] %s619
      %625 = dma.vmem_to_hbm [thread:$0]  %s620, 256, %s5, [#allocation4], 128, 128, 8
    $region49: #{tpu_custom_call.1} parent=1 // pred_fallthru
      _
    // Predicated region
    $region50: #{tpu_custom_call.1} parent=1 // pred_check
      _
    $region51: #{tpu_custom_call.1} parent=1 // pred_check_branch
      %627 = sbr.rel (0) target = $region53
    $region52: #{tpu_custom_call.1} parent=1 // pred_region
      %628 = dma.done [#allocation4], 256
    $region53: #{tpu_custom_call.1} parent=1 // pred_fallthru
      _
    %629 = vsyncpa [#allocation3], 1
    %630 = vsyncpa [#allocation6], 1
    %631 = vsyncpa [#allocation9], 1
    %632 = vsyncpa [#allocation4], 1

</llo_original>
